<compile_context>
chip_gen: v7x
topology: tpu7x:2x2x1
jax: 0.10.0
libtpu: 0.0.40
codegen_flags: <defaults>
</compile_context>

<pallas_src>
import functools

import jax
import jax.numpy as jnp
from jax.experimental import pallas as pl
from jax.experimental.pallas import tpu as pltpu


# ----------------------------- Pallas kernels ------------------------------

def _stats_kernel(x_ref, w_ref, sum_ref, sq_ref, *, use_mxu):
    """Per-chunk statistics of z = W @ x (y minus its bias).

    x block: (1, C_in, TL)   w: (C_out, C_in)
    sum/sq blocks: (1, 1, C_out, 1) -- one partial per (batch, spatial-split).
    Each grid cell owns its whole chunk, so no cross-step accumulation is
    needed and every grid axis can be 'parallel'.
    """
    x = x_ref[0]                                               # (C_in, TL)
    w = w_ref[...]                                             # (C_out, C_in)
    if use_mxu:
        z = jnp.dot(w, x, preferred_element_type=jnp.float32)
    else:
        # Tiny contraction dim: unrolled VPU multiply-accumulate on full vregs
        # beats a <1%-utilized MXU matmul and hides under the DMA.
        z = w[:, 0:1] * x[0:1, :]
        for c in range(1, x.shape[0]):
            z = z + w[:, c:c + 1] * x[c:c + 1, :]
    sum_ref[0, 0] = jnp.sum(z, axis=1, keepdims=True)          # (C_out, 1)
    sq_ref[0, 0] = jnp.sum(z * z, axis=1, keepdims=True)       # (C_out, 1)


def _conv_bn_relu_kernel(x_ref, w_ref, shift_ref, o_ref, *, use_mxu):
    """Fused 1x1 conv with BN-scale-folded weights + folded shift + ReLU.

    x block: (1, C_in, TL); w_fold: (C_out, C_in); shift_fold: (C_out, 1);
    o block: (1, C_out, TL) -- lane-dense interior output, no tail.
    """
    x = x_ref[0]                                               # (C_in, TL)
    w = w_ref[...]                                             # (C_out, C_in)
    shift = shift_ref[...]                                     # (C_out, 1)
    if use_mxu:
        acc = jnp.dot(w, x, preferred_element_type=jnp.float32) + shift
    else:
        acc = w[:, 0:1] * x[0:1, :] + shift
        for c in range(1, x.shape[0]):
            acc = acc + w[:, c:c + 1] * x[c:c + 1, :]
    o_ref[0] = jnp.maximum(acc, 0.0).astype(o_ref.dtype)


# ------------------------------ Sizing helpers -------------------------------

def _vmem_budget_bytes():
    """Per-chip scratch budget (leaves headroom below physical VMEM)."""
    cap = None
    try:
        info = pltpu.get_tpu_info()
        cap = getattr(info, "vmem_capacity_bytes", None)
    except Exception:
        cap = None
    if not cap:
        cap = 64 << 20                      # conservative default (v7x physical)
    return max(16 << 20, min(int(cap * 0.45), 100 << 20))


def _pick_spatial_split(L, N, C_in, C_out, vmem_budget):
    """Number of 128-aligned spatial chunks per image (S * TL == L exactly)."""
    def step_bytes(tl):
        # double-buffered x block + output/intermediate block + weights/stats
        return 4 * (2 * C_in * tl + 2 * C_out * tl + C_out * (C_in + 8))

    S = 1
    # Give the grid >= ~4 independent cells so both v7x TensorCores get work
    # even at batch 1-2 (no effect on v5e/v6e layout or correctness).
    while L % (2 * S * 128) == 0 and N * S < 4:
        S *= 2
    # Shrink tiles further only if a chunk would not fit the VMEM budget.
    while step_bytes(L // S) > vmem_budget // 2 and L % (2 * S * 128) == 0:
        S *= 2
    # TODO(synk): if even the finest 128-aligned split does not fit the budget
    # (pathologically huge images), a masked-tail lane tiling would be needed.
    return S


# ------------------------------- Wrapper -----------------------------------

def conv_bn_relu(x_nchw, conv_w, conv_b, bn_gamma, bn_beta, *, eps=1e-5):
    """x_nchw: (N, C_in, H, W) float32. conv_w: (C_out, C_in, 1, 1)."""
    N, C_in, H, W = x_nchw.shape
    C_out = conv_w.shape[0]
    Hp, Wp = H + 2, W + 2                   # padding=1 with a 1x1 kernel
    L = H * W

    vmem_budget = _vmem_budget_bytes()
    S = _pick_spatial_split(L, N, C_in, C_out, vmem_budget)
    TL = L // S
    use_mxu = (C_in >= 32) or (C_out >= 256)

    cp = pltpu.CompilerParams(
        dimension_semantics=("parallel", "parallel"),
        vmem_limit_bytes=vmem_budget)

    # Raw input, no padding, no copy: channels on the sublane axis, the
    # flattened spatial axis on the lane axis.
    x_flat = x_nchw.astype(jnp.float32).reshape(N, C_in, L)
    w = conv_w.reshape(C_out, C_in).astype(jnp.float32)
    b = conv_b.astype(jnp.float32)

    # ---------------- Pass 1: per-output-channel sums of z = W x ----------------
    sum_z, sq_z = pl.pallas_call(
        functools.partial(_stats_kernel, use_mxu=use_mxu),
        out_shape=(
            jax.ShapeDtypeStruct((N, S, C_out, 1), jnp.float32),
            jax.ShapeDtypeStruct((N, S, C_out, 1), jnp.float32),
        ),
        grid_spec=pl.GridSpec(
            grid=(N, S),
            in_specs=[
                pl.BlockSpec((1, C_in, TL), lambda n, s: (n, 0, s)),
                pl.BlockSpec((C_out, C_in), lambda n, s: (0, 0)),
            ],
            out_specs=(
                pl.BlockSpec((1, 1, C_out, 1), lambda n, s: (n, s, 0, 0)),
                pl.BlockSpec((1, 1, C_out, 1), lambda n, s: (n, s, 0, 0)),
            ),
        ),
        compiler_params=cp,
    )(x_flat, w)

    # -------- Glue (tiny): batch statistics of y = W x + b over all Hp*Wp --------
    # The conv's zero halo contributes nothing to sum_z / sq_z, but does count
    # toward M; since the stats are of z = y - b, the bias cancels exactly.
    M = float(N * Hp * Wp)
    mz = jnp.sum(sum_z, axis=(0, 1))[:, 0] / M                  # E[z]   (C_out,)
    ez2 = jnp.sum(sq_z, axis=(0, 1))[:, 0] / M                  # E[z^2] (C_out,)
    var = jnp.maximum(ez2 - mz * mz, 0.0)                       # biased, clamped
    inv_std = jax.lax.rsqrt(var + eps)
    scale = bn_gamma.astype(jnp.float32) * inv_std              # (C_out,)
    w_fold = w * scale[:, None]                                 # BN scale folded in
    shift_fold = (bn_beta.astype(jnp.float32) - scale * mz)[:, None]  # (C_out, 1)

    # -------- Pass 2: interior = ReLU(w_fold x + shift_fold), lane-dense --------
    interior = pl.pallas_call(
        functools.partial(_conv_bn_relu_kernel, use_mxu=use_mxu),
        out_shape=jax.ShapeDtypeStruct((N, C_out, L), jnp.float32),
        grid_spec=pl.GridSpec(
            grid=(N, S),
            in_specs=[
                pl.BlockSpec((1, C_in, TL), lambda n, s: (n, 0, s)),
                pl.BlockSpec((C_out, C_in), lambda n, s: (0, 0)),
                pl.BlockSpec((C_out, 1), lambda n, s: (0, 0)),
            ],
            out_specs=pl.BlockSpec((1, C_out, TL), lambda n, s: (n, 0, s)),
        ),
        compiler_params=cp,
    )(x_flat, w_fold, shift_fold)

    # -------- 1-px border = per-channel constant ReLU(shift_fold) --------
    # Single fused pad+select pass in XLA (border positions are where x = 0,
    # i.e. y = b -> BN -> shift_fold).  In-kernel padded assembly was rejected:
    # the row/column weave is not expressible as a rectangular BlockSpec and
    # an in-kernel lane->(sublane,lane) reshape is a lowering risk.
    border = jnp.maximum(shift_fold, 0.0).reshape(1, C_out, 1, 1)
    out = jnp.pad(interior.reshape(N, C_out, H, W),
                  ((0, 0), (0, 0), (1, 1), (1, 1)))
    rr = jnp.arange(Hp)[:, None]
    cc = jnp.arange(Wp)[None, :]
    is_border = (rr == 0) | (rr == Hp - 1) | (cc == 0) | (cc == Wp - 1)
    return jnp.where(is_border[None, None], border, out)


# ------------------------------ Reference ----------------------------------

def conv_bn_relu_ref(x_nchw, conv_w, conv_b, bn_gamma, bn_beta, eps=1e-5):
    C_out, C_in = conv_w.shape[0], conv_w.shape[1]
    x_pad = jnp.pad(x_nchw, ((0, 0), (0, 0), (1, 1), (1, 1)))
    w = conv_w.reshape(C_out, C_in)
    y = jnp.einsum("oc,nchw->nohw", w, x_pad) + conv_b[None, :, None, None]
    mean = jnp.mean(y, axis=(0, 2, 3), keepdims=True)
    var = jnp.mean((y - mean) ** 2, axis=(0, 2, 3), keepdims=True)
    y = (y - mean) * jax.lax.rsqrt(var + eps) * bn_gamma[None, :, None, None] \
        + bn_beta[None, :, None, None]
    return jnp.maximum(y, 0.0)


# -------------------------------- Main --------------------------------------

if __name__ == "__main__":
    key = jax.random.PRNGKey(0)
    k_x, k_w, k_b, k_g, k_be = jax.random.split(key, 5)

    N, C_in, C_out, H, W = 2, 4, 8, 16, 16

    x = jax.random.normal(k_x, (N, C_in, H, W), dtype=jnp.float32)
    conv_w = jax.random.normal(k_w, (C_out, C_in, 1, 1), dtype=jnp.float32) * 0.1
    conv_b = jax.random.normal(k_b, (C_out,), dtype=jnp.float32) * 0.1
    bn_gamma = 1.0 + 0.1 * jax.random.normal(k_g, (C_out,), dtype=jnp.float32)
    bn_beta = 0.1 * jax.random.normal(k_be, (C_out,), dtype=jnp.float32)

    out = conv_bn_relu(x, conv_w, conv_b, bn_gamma, bn_beta)
    out = jax.block_until_ready(out)

    ref = conv_bn_relu_ref(x, conv_w, conv_b, bn_gamma, bn_beta)
    assert out.shape == (N, C_out, H + 2, W + 2), out.shape
    max_err = float(jnp.max(jnp.abs(out - ref)))
    assert max_err < 5e-4, max_err

    print("KERNEL_OK")
</pallas_src>

<mosaic_0001>
module attributes {stable_mosaic.version = 11 : i64} {
  func.func @_stats_kernel(%arg0: i32, %arg1: i32, %arg2: memref<1x4x128xf32, #tpu.memory_space<vmem>>, %arg3: memref<8x4xf32, #tpu.memory_space<vmem>>, %arg4: memref<1x1x8x1xf32, #tpu.memory_space<vmem>>, %arg5: memref<1x1x8x1xf32, #tpu.memory_space<vmem>>) attributes {dimension_semantics = [#tpu.dimension_semantics<parallel>, #tpu.dimension_semantics<parallel>], iteration_bounds = array<i64: 2, 2>, scalar_prefetch = 0 : i64, scratch_operands = 0 : i64, tpu.core_type = #tpu.core_type<tc>, window_params = [{transform_indices = @transform_0, window_bounds = array<i64: 1, 4, 128>}, {pipeline_mode = #tpu.pipeline_mode<synchronous>, transform_indices = @transform_1, window_bounds = array<i64: 8, 4>}, {transform_indices = @transform_2, window_bounds = array<i64: 1, 1, 8, 1>}, {transform_indices = @transform_3, window_bounds = array<i64: 1, 1, 8, 1>}]} {
    %c0 = arith.constant 0 : index
    %c0_0 = arith.constant 0 : index
    %c0_1 = arith.constant 0 : index
    %0 = vector.load %arg2[%c0, %c0_0, %c0_1] : memref<1x4x128xf32, #tpu.memory_space<vmem>>, vector<1x4x128xf32>
    %1 = vector.shape_cast %0 : vector<1x4x128xf32> to vector<4x128xf32>
    %c0_2 = arith.constant 0 : index
    %c0_3 = arith.constant 0 : index
    %2 = vector.load %arg3[%c0_2, %c0_3] : memref<8x4xf32, #tpu.memory_space<vmem>>, vector<8x4xf32>
    %3 = vector.extract_strided_slice %2 {offsets = [0, 0], sizes = [8, 1], strides = [1, 1]} : vector<8x4xf32> to vector<8x1xf32>
    %4 = vector.extract_strided_slice %1 {offsets = [0, 0], sizes = [1, 128], strides = [1, 1]} : vector<4x128xf32> to vector<1x128xf32>
    %5 = vector.broadcast %3 : vector<8x1xf32> to vector<8x128xf32>
    %6 = vector.broadcast %4 : vector<1x128xf32> to vector<8x128xf32>
    %7 = arith.mulf %5, %6 : vector<8x128xf32>
    %8 = vector.extract_strided_slice %2 {offsets = [0, 1], sizes = [8, 1], strides = [1, 1]} : vector<8x4xf32> to vector<8x1xf32>
    %9 = vector.extract_strided_slice %1 {offsets = [1, 0], sizes = [1, 128], strides = [1, 1]} : vector<4x128xf32> to vector<1x128xf32>
    %10 = vector.broadcast %8 : vector<8x1xf32> to vector<8x128xf32>
    %11 = vector.broadcast %9 : vector<1x128xf32> to vector<8x128xf32>
    %12 = arith.mulf %10, %11 : vector<8x128xf32>
    %13 = arith.addf %7, %12 : vector<8x128xf32>
    %14 = vector.extract_strided_slice %2 {offsets = [0, 2], sizes = [8, 1], strides = [1, 1]} : vector<8x4xf32> to vector<8x1xf32>
    %15 = vector.extract_strided_slice %1 {offsets = [2, 0], sizes = [1, 128], strides = [1, 1]} : vector<4x128xf32> to vector<1x128xf32>
    %16 = vector.broadcast %14 : vector<8x1xf32> to vector<8x128xf32>
    %17 = vector.broadcast %15 : vector<1x128xf32> to vector<8x128xf32>
    %18 = arith.mulf %16, %17 : vector<8x128xf32>
    %19 = arith.addf %13, %18 : vector<8x128xf32>
    %20 = vector.extract_strided_slice %2 {offsets = [0, 3], sizes = [8, 1], strides = [1, 1]} : vector<8x4xf32> to vector<8x1xf32>
    %21 = vector.extract_strided_slice %1 {offsets = [3, 0], sizes = [1, 128], strides = [1, 1]} : vector<4x128xf32> to vector<1x128xf32>
    %22 = vector.broadcast %20 : vector<8x1xf32> to vector<8x128xf32>
    %23 = vector.broadcast %21 : vector<1x128xf32> to vector<8x128xf32>
    %24 = arith.mulf %22, %23 : vector<8x128xf32>
    %25 = arith.addf %19, %24 : vector<8x128xf32>
    %cst = arith.constant dense<0.000000e+00> : vector<8xf32>
    %26 = vector.multi_reduction <add>, %25, %cst [1] : vector<8x128xf32> to vector<8xf32>
    %27 = vector.shape_cast %26 : vector<8xf32> to vector<8x1xf32>
    %c0_4 = arith.constant 0 : index
    %c0_5 = arith.constant 0 : index
    %c0_6 = arith.constant 0 : index
    %c0_7 = arith.constant 0 : index
    %28 = vector.load %arg4[%c0_4, %c0_5, %c0_6, %c0_7] : memref<1x1x8x1xf32, #tpu.memory_space<vmem>>, vector<1x1x8x1xf32>
    %29 = vector.shape_cast %28 : vector<1x1x8x1xf32> to vector<8x1xf32>
    %30 = vector.shape_cast %27 : vector<8x1xf32> to vector<1x1x8x1xf32>
    tpu.vector_store %arg4[%c0_4, %c0_5, %c0_6, %c0_7], %30 {strides = array<i32>} : memref<1x1x8x1xf32, #tpu.memory_space<vmem>>, vector<1x1x8x1xf32>,
    %31 = arith.mulf %25, %25 : vector<8x128xf32>
    %cst_8 = arith.constant dense<0.000000e+00> : vector<8xf32>
    %32 = vector.multi_reduction <add>, %31, %cst_8 [1] : vector<8x128xf32> to vector<8xf32>
    %33 = vector.shape_cast %32 : vector<8xf32> to vector<8x1xf32>
    %c0_9 = arith.constant 0 : index
    %c0_10 = arith.constant 0 : index
    %c0_11 = arith.constant 0 : index
    %c0_12 = arith.constant 0 : index
    %34 = vector.load %arg5[%c0_9, %c0_10, %c0_11, %c0_12] : memref<1x1x8x1xf32, #tpu.memory_space<vmem>>, vector<1x1x8x1xf32>
    %35 = vector.shape_cast %34 : vector<1x1x8x1xf32> to vector<8x1xf32>
    %36 = vector.shape_cast %33 : vector<8x1xf32> to vector<1x1x8x1xf32>
    tpu.vector_store %arg5[%c0_9, %c0_10, %c0_11, %c0_12], %36 {strides = array<i32>} : memref<1x1x8x1xf32, #tpu.memory_space<vmem>>, vector<1x1x8x1xf32>,
    return
  }
  func.func @transform_0(%arg0: i32, %arg1: i32) -> (i32, i32, i32) {
    %c0_i32 = arith.constant 0 : i32
    %c0_i32_0 = arith.constant 0 : i32
    return %arg0, %c0_i32, %arg1 : i32, i32, i32
  }
  func.func @transform_1(%arg0: i32, %arg1: i32) -> (i32, i32) {
    %c0_i32 = arith.constant 0 : i32
    %c0_i32_0 = arith.constant 0 : i32
    %c0_i32_1 = arith.constant 0 : i32
    return %c0_i32, %c0_i32_0 : i32, i32
  }
  func.func @transform_2(%arg0: i32, %arg1: i32) -> (i32, i32, i32, i32) {
    %c0_i32 = arith.constant 0 : i32
    %c0_i32_0 = arith.constant 0 : i32
    %c0_i32_1 = arith.constant 0 : i32
    return %arg0, %arg1, %c0_i32, %c0_i32_0 : i32, i32, i32, i32
  }
  func.func @transform_3(%arg0: i32, %arg1: i32) -> (i32, i32, i32, i32) {
    %c0_i32 = arith.constant 0 : i32
    %c0_i32_0 = arith.constant 0 : i32
    %c0_i32_1 = arith.constant 0 : i32
    return %arg0, %arg1, %c0_i32, %c0_i32_0 : i32, i32, i32, i32
  }
}

</mosaic_0001>

<llo_original>
// kernel: tpu_custom_call.1
$region0: #{tpu_custom_call.1}
  #allocation0 [shape = 'u32[]', space=smem, size = 0x4, offset = 0x4, fixed_abs, tag = 'smem constant byte address 0x4 - core index']
  #allocation1 [shape = 'u32[144,128]{1,0:T(1,128)}', space=vmem, size = 0x12000, scoped, tag = 'internal scratch']
  %s0 = inlined_call_operand.hbm [shape: f32[2,4,256], index: 0, kind: input, shape index: {}]
  %s1 = inlined_call_operand.vmem [shape: f32[8,4], index: 1, kind: input, shape index: {}]
  %s2 = inlined_call_operand.vmem [shape: f32[2,2,8,1], index: 2, kind: output, shape index: {0}]
  %s3 = inlined_call_operand.vmem [shape: f32[2,2,8,1], index: 3, kind: output, shape index: {1}]
  %4 = xla_tuple %s2, %s3
  %s5 = sld [smem:[#allocation0]]
  $region53: #{tpu_custom_call.1} parent=0
    _
  %s7 = ssub.s32 1, %s5
  %s8 = scalar_select 0, %s7, %s5
  $region1: #{tpu_custom_call.1} parent=0
    #allocation2 [shape = 'u8[4096]{0}', space=vmem, size = 0x1000, scoped, tag = 'input window, operand 0']
    #allocation3 [shape = 's32[2]{0}', space=sflag, size = 0x8, scoped, tag = 'scoped memory for tpu_custom_call.1']
    %9 = vsyncpa [#allocation3], 0
    %s10 = scalar_lea.sflag [#allocation3], 1
    %11 = vsyncpa %s10, 0
    loop: start=0, step=1, limit=6
    $region2: #{tpu_custom_call.1} parent=1 // loop_pre_header
      _
    $region3: #{tpu_custom_call.1} parent=1 // loop_header
      %s13 = sphi 0, %s17
      %p14 = scmp.ge.s32.totalorder %s13, 6
      %s20 = sphi 0, %s32
      %s21 = sphi 0, %s28
      %s22 = sphi 0, %s20
      %s23 = sphi 0, %s21
      %s24 = sphi 0, %s22
      %s25 = sphi 0, %s23
      %s37 = sphi 0, %s39
      %s40 = sphi 0, %s37
      %s41 = sphi 0, %s40
      %s57 = sphi 0, %s41
      %s61 = sphi 0, %s61
      %s63 = sphi 0, %s61
      %s64 = sphi 0, %s63
      %s78 = sphi 0, %s64
      %s86 = sphi 0, %s88
      %s89 = sphi 0, %s86
      %s90 = sphi 0, %s89
      %s106 = sphi 0, %s90
      %s114 = sphi 0, %s116
      %s117 = sphi 0, %s114
      %s118 = sphi 0, %s117
      %s134 = sphi 0, %s118
    $region4: #{tpu_custom_call.1} parent=1 // loop_header_branch
      %16 = sbr.rel (%p14) target = $region8
    $region5: #{tpu_custom_call.1} parent=1 // loop_body
      %s18 = ssub.s32 %s13, 1
      %s19 = ssub.s32 %s13, 2
      %s26 = sadd.s32 1, %s21
      %p27 = scmp.ge.s32.totalorder %s26, 2
      %s28 = scalar_select %p27, 0, %s26
      %s29 = sadd.s32 1, %s20
      %s30 = scalar_select %p27, %s29, %s20
      %p31 = scmp.ge.s32.totalorder %s30, 2
      %s32 = scalar_select %p31, 0, %s30
      %s33 = ssub.s32 %s20, %s32
      %s34 = ssub.s32 %s21, %s28
      %s35 = sor.u32 %s33, %s34
      %p36 = scmp.eq.s32.totalorder %s35, 0
      %s38 = sadd.s32 %s37, 1
      %s39 = scalar_select %p36, %s37, %s38
      %p42 = pneg %p36
      %p43 = scmp.eq.s32.totalorder %s13, 3
      %p44 = por %p42, %p43
      %p45 = scmp.ne.s32.totalorder %s37, %s40
      %p46 = scmp.eq.s32.totalorder %s13, 0
      %p47 = por %p45, %p46
      %p48 = scmp.ne.s32.totalorder %s37, %s40
      %p49 = scmp.eq.s32.totalorder %s18, 3
      %p50 = por %p48, %p49
      %p51 = scmp.ne.s32.totalorder %s40, %s41
      %p52 = scmp.eq.s32.totalorder %s18, 0
      %p53 = por %p51, %p52
      %p54 = scmp.ne.s32.totalorder %s40, %s41
      %p55 = scmp.eq.s32.totalorder %s19, 3
      %p56 = por %p54, %p55
      %p58 = scmp.ne.s32.totalorder %s41, %s57
      %p59 = scmp.eq.s32.totalorder %s19, 0
      %p60 = por %p58, %p59
      %s62 = sadd.s32 %s61, 1
      %p65 = scmp.eq.s32.totalorder %s13, 3
      %p66 = scmp.ne.s32.totalorder %s61, %s63
      %p67 = scmp.eq.s32.totalorder %s13, 0
      %p68 = por %p66, %p67
      %p69 = scmp.ne.s32.totalorder %s61, %s63
      %p70 = scmp.eq.s32.totalorder %s18, 3
      %p71 = por %p69, %p70
      %p72 = scmp.ne.s32.totalorder %s63, %s64
      %p73 = scmp.eq.s32.totalorder %s18, 0
      %p74 = por %p72, %p73
      %p75 = scmp.ne.s32.totalorder %s63, %s64
      %p76 = scmp.eq.s32.totalorder %s19, 3
      %p77 = por %p75, %p76
      %p79 = scmp.ne.s32.totalorder %s64, %s78
      %p80 = scmp.eq.s32.totalorder %s19, 0
      %p81 = por %p79, %p80
      %s82 = ssub.s32 %s20, %s32
      %s83 = ssub.s32 %s21, %s28
      %s84 = sor.u32 %s82, %s83
      %p85 = scmp.eq.s32.totalorder %s84, 0
      %s87 = sadd.s32 %s86, 1
      %s88 = scalar_select %p85, %s86, %s87
      %p91 = pneg %p85
      %p92 = scmp.eq.s32.totalorder %s13, 3
      %p93 = por %p91, %p92
      %p94 = scmp.ne.s32.totalorder %s86, %s89
      %p95 = scmp.eq.s32.totalorder %s13, 0
      %p96 = por %p94, %p95
      %p97 = scmp.ne.s32.totalorder %s86, %s89
      %p98 = scmp.eq.s32.totalorder %s18, 3
      %p99 = por %p97, %p98
      %p100 = scmp.ne.s32.totalorder %s89, %s90
      %p101 = scmp.eq.s32.totalorder %s18, 0
      %p102 = por %p100, %p101
      %p103 = scmp.ne.s32.totalorder %s89, %s90
      %p104 = scmp.eq.s32.totalorder %s19, 3
      %p105 = por %p103, %p104
      %p107 = scmp.ne.s32.totalorder %s90, %s106
      %p108 = scmp.eq.s32.totalorder %s19, 0
      %p109 = por %p107, %p108
      %s110 = ssub.s32 %s20, %s32
      %s111 = ssub.s32 %s21, %s28
      %s112 = sor.u32 %s110, %s111
      %p113 = scmp.eq.s32.totalorder %s112, 0
      %s115 = sadd.s32 %s114, 1
      %s116 = scalar_select %p113, %s114, %s115
      %p119 = pneg %p113
      %p120 = scmp.eq.s32.totalorder %s13, 3
      %p121 = por %p119, %p120
      %p122 = scmp.ne.s32.totalorder %s114, %s117
      %p123 = scmp.eq.s32.totalorder %s13, 0
      %p124 = por %p122, %p123
      %p125 = scmp.ne.s32.totalorder %s114, %s117
      %p126 = scmp.eq.s32.totalorder %s18, 3
      %p127 = por %p125, %p126
      %p128 = scmp.ne.s32.totalorder %s117, %s118
      %p129 = scmp.eq.s32.totalorder %s18, 0
      %p130 = por %p128, %p129
      %p131 = scmp.ne.s32.totalorder %s117, %s118
      %p132 = scmp.eq.s32.totalorder %s19, 3
      %p133 = por %p131, %p132
      %p135 = scmp.ne.s32.totalorder %s118, %s134
      %p136 = scmp.eq.s32.totalorder %s19, 0
      %p137 = por %p135, %p136
      %p138 = scmp.le.s32.totalorder 1, %s13
      %p139 = scmp.lt.s32.totalorder %s13, 5
      %p140 = pnand %p138, %p139
      %p141 = pneg %p140
      // Predicated region
      $region9: #{tpu_custom_call.1} parent=5 // pred_check
        _
      $region10: #{tpu_custom_call.1} parent=5 // pred_check_branch
        %143 = sbr.rel (%p140) target = $region12
      $region11: #{tpu_custom_call.1} parent=5 // pred_region
        %s144 = ssub.s32 %s13, 1
        // Predicated region
        $region13: #{tpu_custom_call.1} parent=11 // pred_check
          %p145 = pneg %p74
        $region14: #{tpu_custom_call.1} parent=11 // pred_check_branch
          %147 = sbr.rel (%p145) target = $region16
        $region15: #{tpu_custom_call.1} parent=11 // pred_region
          _
        $region16: #{tpu_custom_call.1} parent=11 // pred_fallthru
          _
      $region12: #{tpu_custom_call.1} parent=5 // pred_fallthru
        _
      %p148 = scmp.lt.s32.totalorder %s13, 4
      // Predicated region
      $region17: #{tpu_custom_call.1} parent=5 // pred_check
        %p149 = pneg %p148
      $region18: #{tpu_custom_call.1} parent=5 // pred_check_branch
        %151 = sbr.rel (%p149) target = $region20
      $region19: #{tpu_custom_call.1} parent=5 // pred_region
        // Predicated region
        $region21: #{tpu_custom_call.1} parent=19 // pred_check
          %p152 = pneg %p47
        $region22: #{tpu_custom_call.1} parent=19 // pred_check_branch
          %154 = sbr.rel (%p152) target = $region24
        $region23: #{tpu_custom_call.1} parent=19 // pred_region
          %s155 = sand.u32 %s37, 1
          %s156 = scalar_lea.sflag [#allocation3], %s155
          %s157 = sand.u32 %s37, 1
          %s158 = smul.addr %s157, 4
          %s159 = scalar_lea.vmem [#allocation2], %s158
          %s161 = ssub.s32 64, 64
          %162 = vsyncadd %s156, %s161
          %s163 = smul.addr %s20, 2
          %s164 = sadd.s32 %s21, %s163
          %s165 = smul.addr %s164, 64
          %s166 = scalar_lea.hbm %s0, %s165
          %s168 = sshll.u32 %s159, 4
          %s169 = int_to_ptr.vmem [resolvable:$true] %s168
          %171 = dma.hbm_to_vmem [thread:$0]  %s166, 64, %s169, %s156
        $region24: #{tpu_custom_call.1} parent=19 // pred_fallthru
          _
      $region20: #{tpu_custom_call.1} parent=5 // pred_fallthru
        _
      %p172 = scmp.le.s32.totalorder 1, %s13
      %p173 = scmp.lt.s32.totalorder %s13, 5
      %p174 = pnand %p172, %p173
      %p175 = pneg %p174
      // Predicated region
      $region25: #{tpu_custom_call.1} parent=5 // pred_check
        _
      $region26: #{tpu_custom_call.1} parent=5 // pred_check_branch
        %177 = sbr.rel (%p174) target = $region28
      $region27: #{tpu_custom_call.1} parent=5 // pred_region
        %s178 = ssub.s32 %s13, 1
        %s179 = sand.u32 %s40, 1
        %s180 = scalar_lea.sflag [#allocation3], %s179
        %s181 = sand.u32 %s40, 1
        %s182 = smul.addr %s181, 4
        %s183 = scalar_lea.vmem [#allocation2], %s182
        // Predicated region
        $region29: #{tpu_custom_call.1} parent=27 // pred_check
          %p184 = pneg %p53
        $region30: #{tpu_custom_call.1} parent=27 // pred_check_branch
          %186 = sbr.rel (%p184) target = $region32
        $region31: #{tpu_custom_call.1} parent=27 // pred_region
          %187 = dma.done %s180, 64
        $region32: #{tpu_custom_call.1} parent=27 // pred_fallthru
          _
        %s188 = sand.u32 %s40, 1
        %s189 = scalar_lea.sflag [#allocation3], %s188
        %s190 = sand.u32 %s40, 1
        %s191 = smul.addr %s190, 4
        %s192 = scalar_lea.vmem [#allocation2], %s191
        %p193 = pneg %p53
        %p194 = pneg %p50
        %p195 = pneg %p74
        %p196 = pneg %p71
        %p197 = pneg %p102
        %p198 = pneg %p99
        %p199 = scmp.lt.s32.totalorder %s22, 1
        %s200 = scalar_select %p199, %s22, 1
        %p201 = scmp.lt.s32.totalorder %s23, 1
        %s202 = scalar_select %p201, %s23, 1
        %s203 = smul.addr %s200, 2
        %s204 = sadd.s32 %s202, %s203
        %s205 = smul.addr %s204, 8
        %s206 = scalar_lea.vmem %s2, %s205
        %p207 = pneg %p130
        %p208 = pneg %p127
        %p209 = scmp.lt.s32.totalorder %s22, 1
        %s210 = scalar_select %p209, %s22, 1
        %p211 = scmp.lt.s32.totalorder %s23, 1
        %s212 = scalar_select %p211, %s23, 1
        %s213 = smul.addr %s210, 2
        %s214 = sadd.s32 %s212, %s213
        %s215 = smul.addr %s214, 8
        %s216 = scalar_lea.vmem %s3, %s215
        %p217 = scmp.lt.s32.totalorder %s22, 1
        %s218 = scalar_select %p217, %s22, 1
        %p219 = scmp.lt.s32.totalorder %s23, 1
        %s220 = scalar_select %p219, %s23, 1
        %s221 = smul.addr %s218, 2
        %s222 = sadd.s32 %s220, %s221
        %s223 = smul.addr %s222, 8
        %s224 = scalar_lea.vmem %s2, %s223
        %p225 = scmp.lt.s32.totalorder %s22, 1
        %s226 = scalar_select %p225, %s22, 1
        %p227 = scmp.lt.s32.totalorder %s23, 1
        %s228 = scalar_select %p227, %s23, 1
        %s229 = smul.addr %s226, 2
        %s230 = sadd.s32 %s228, %s229
        %s231 = smul.addr %s230, 8
        %s232 = scalar_lea.vmem %s3, %s231
        %v233 = vld [vmem:[%s183] sm:$0xf]
        %v234 = vld [vmem:[%s1] sm:$0xff]
        %236 = vset.pattern.permute.xlu0 0
        %237 = vperm.xlu0 %236, %v234
        %v238 = vpop.permute.xlu0 %237
        %v240 = vlaneseq
        %v241 = vshrl.u32 %v240, 7
        %v242 = vsub.s32 0, %v241
        %v243 = vrot.slane %v233, %v242
        %v244 = vmul.f32 %v238, %v243
        %245 = vset.pattern.permute.xlu0 1
        %246 = vperm.xlu0 %245, %v234
        %v247 = vpop.permute.xlu0 %246
        %v249 = vlaneseq
        %v250 = vshrl.u32 %v249, 7
        %v251 = vsub.s32 1, %v250
        %v252 = vrot.slane %v233, %v251
        %v253 = vmul.f32 %v247, %v252
        %v254 = vadd.f32 %v244, %v253
        %255 = vset.pattern.permute.xlu0 2
        %256 = vperm.xlu0 %255, %v234
        %v257 = vpop.permute.xlu0 %256
        %v259 = vlaneseq
        %v260 = vshrl.u32 %v259, 7
        %v261 = vsub.s32 2, %v260
        %v262 = vrot.slane %v233, %v261
        %v263 = vmul.f32 %v257, %v262
        %v264 = vadd.f32 %v254, %v263
        %265 = vset.pattern.permute.xlu0 3
        %266 = vperm.xlu0 %265, %v234
        %v267 = vpop.permute.xlu0 %266
        %v269 = vlaneseq
        %v270 = vshrl.u32 %v269, 7
        %v271 = vsub.s32 3, %v270
        %v272 = vrot.slane %v233, %v271
        %v273 = vmul.f32 %v267, %v272
        %v274 = vadd.f32 %v264, %v273
        %275 = vadd.xlane.f32.xlu0 %v274
        %v276 = vpop.xlane.xlu0 %275
        %vm277 = vcmask 7168
        %278 = vst.msk [vmem:[%s224] sm:$0xff] %vm277, %v276
        %v279 = vmul.f32 %v274, %v274
        %280 = vadd.xlane.f32.xlu0 %v279
        %v281 = vpop.xlane.xlu0 %280
        %282 = vst.msk [vmem:[%s232] sm:$0xff] %vm277, %v281
        %p283 = scmp.lt.s32.totalorder %s22, 1
        %s284 = scalar_select %p283, %s22, 1
        %p285 = scmp.lt.s32.totalorder %s23, 1
        %s286 = scalar_select %p285, %s23, 1
        %s287 = smul.addr %s284, 2
        %s288 = sadd.s32 %s286, %s287
        %s289 = smul.addr %s288, 8
        %s290 = scalar_lea.vmem %s2, %s289
        %p291 = scmp.lt.s32.totalorder %s22, 1
        %s292 = scalar_select %p291, %s22, 1
        %p293 = scmp.lt.s32.totalorder %s23, 1
        %s294 = scalar_select %p293, %s23, 1
        %s295 = smul.addr %s292, 2
        %s296 = sadd.s32 %s294, %s295
        %s297 = smul.addr %s296, 8
        %s298 = scalar_lea.vmem %s3, %s297
        // Predicated region
        $region33: #{tpu_custom_call.1} parent=27 // pred_check
          %p299 = pneg %p99
        $region34: #{tpu_custom_call.1} parent=27 // pred_check_branch
          %301 = sbr.rel (%p299) target = $region36
        $region35: #{tpu_custom_call.1} parent=27 // pred_region
          _
        $region36: #{tpu_custom_call.1} parent=27 // pred_fallthru
          _
        // Predicated region
        $region37: #{tpu_custom_call.1} parent=27 // pred_check
          %p302 = pneg %p127
        $region38: #{tpu_custom_call.1} parent=27 // pred_check_branch
          %304 = sbr.rel (%p302) target = $region40
        $region39: #{tpu_custom_call.1} parent=27 // pred_region
          _
        $region40: #{tpu_custom_call.1} parent=27 // pred_fallthru
          _
      $region28: #{tpu_custom_call.1} parent=5 // pred_fallthru
        _
      %p305 = scmp.le.s32.totalorder 2, %s13
      // Predicated region
      $region41: #{tpu_custom_call.1} parent=5 // pred_check
        %p306 = pneg %p305
      $region42: #{tpu_custom_call.1} parent=5 // pred_check_branch
        %308 = sbr.rel (%p306) target = $region44
      $region43: #{tpu_custom_call.1} parent=5 // pred_region
        %s309 = ssub.s32 %s13, 2
        // Predicated region
        $region45: #{tpu_custom_call.1} parent=43 // pred_check
          %p310 = pneg %p105
        $region46: #{tpu_custom_call.1} parent=43 // pred_check_branch
          %312 = sbr.rel (%p310) target = $region48
        $region47: #{tpu_custom_call.1} parent=43 // pred_region
          %p313 = scmp.lt.s32.totalorder %s24, 1
          %s314 = scalar_select %p313, %s24, 1
          %p315 = scmp.lt.s32.totalorder %s25, 1
          %s316 = scalar_select %p315, %s25, 1
          %s317 = smul.addr %s314, 2
          %s318 = sadd.s32 %s316, %s317
          %s319 = smul.addr %s318, 8
          %s320 = scalar_lea.vmem %s2, %s319
        $region48: #{tpu_custom_call.1} parent=43 // pred_fallthru
          _
        // Predicated region
        $region49: #{tpu_custom_call.1} parent=43 // pred_check
          %p321 = pneg %p133
        $region50: #{tpu_custom_call.1} parent=43 // pred_check_branch
          %323 = sbr.rel (%p321) target = $region52
        $region51: #{tpu_custom_call.1} parent=43 // pred_region
          %p324 = scmp.lt.s32.totalorder %s24, 1
          %s325 = scalar_select %p324, %s24, 1
          %p326 = scmp.lt.s32.totalorder %s25, 1
          %s327 = scalar_select %p326, %s25, 1
          %s328 = smul.addr %s325, 2
          %s329 = sadd.s32 %s327, %s328
          %s330 = smul.addr %s329, 8
          %s331 = scalar_lea.vmem %s3, %s330
        $region52: #{tpu_custom_call.1} parent=43 // pred_fallthru
          _
      $region44: #{tpu_custom_call.1} parent=5 // pred_fallthru
        _
    $region6: #{tpu_custom_call.1} parent=1 // loop_footer
      %s17 = sadd.s32 1, %s13
    $region7: #{tpu_custom_call.1} parent=1 // loop_footer_branch
      %12 = sbr.rel target = $region3
    $region8: #{tpu_custom_call.1} parent=1 // loop_exit
      _
    %332 = vsyncpa [#allocation3], 1
    %s333 = scalar_lea.sflag [#allocation3], 1
    %334 = vsyncpa %s333, 1

</llo_original>
